<compile_context>
chip_gen: v5e
topology: v5e:2x2
jax: 0.10.0
libtpu: 0.0.40
codegen_flags: <defaults>
</compile_context>

<pallas_src>
import functools

import numpy as np
import jax
import jax.numpy as jnp
from jax import lax
from jax.experimental import pallas as pl
from jax.experimental.pallas import tpu as pltpu

K_SOBEL = 3


def get_sobel_kernel(k=3):
    r = np.linspace(-(k // 2), k // 2, k)
    x, y = np.meshgrid(r, r)
    num = x
    den = x ** 2 + y ** 2
    den[:, k // 2] = 1
    return (num / den).astype(np.float32)


SOBEL_X = get_sobel_kernel(K_SOBEL)      # separable: [0.5, 1, 0.5]^T ⊗ [-1, 0, 1]
SOBEL_Y = SOBEL_X.T
RGB_W = np.array([0.299, 0.587, 0.114], dtype=np.float32)
MEAN = np.array([0.5, 0.5, 0.5], dtype=np.float32)
STD = np.array([0.5, 0.5, 0.5], dtype=np.float32)
BIAS = MEAN / STD                        # zero-sum taps -> contributes 0 to output


def _sobel_kernel(x_ref, halo_ref, o_ref, *, TH, W):
    # x_ref:    (3, TH, W)  body rows of one batch element / H-tile
    # halo_ref: (3, 2, W)   [top halo row, bottom halo row], already reflected
    #                       at the image borders by the wrapper
    # o_ref:    (2, TH, W)  (grad_x, grad_y)
    w0, w1, w2 = float(RGB_W[0]), float(RGB_W[1]), float(RGB_W[2])

    # rgb2gray; the +mean/std bias is mathematically irrelevant here (dropped).
    body = w0 * x_ref[0] + w1 * x_ref[1] + w2 * x_ref[2]            # (TH, W)
    halo = w0 * halo_ref[0] + w1 * halo_ref[1] + w2 * halo_ref[2]   # (2, W)

    gray = jnp.concatenate([halo[0:1], body, halo[1:2]], axis=0)    # (TH+2, W)
    # Reflection pad along W: pad col -1 = col 1, pad col W = col W-2.
    grayp = jnp.concatenate([gray[:, 1:2], gray, gray[:, W - 2:W - 1]],
                            axis=1)                                  # (TH+2, W+2)

    left, mid, right = grayp[:, :-2], grayp[:, 1:-1], grayp[:, 2:]   # (TH+2, W)
    dx = right - left                       # horizontal [-1, 0, 1]
    sx = 0.5 * (left + right) + mid         # horizontal [0.5, 1, 0.5]

    gx = 0.5 * (dx[:-2] + dx[2:]) + dx[1:-1]     # vertical smooth -> Sobel-x
    gy = sx[2:] - sx[:-2]                        # vertical diff   -> Sobel-y

    o_ref[0] = gx.astype(o_ref.dtype)
    o_ref[1] = gy.astype(o_ref.dtype)


def _pick_tile_h(H, W):
    """Largest H tile that divides H, is a multiple of 8, and whose
    double-buffered (in + out) per-step footprint fits comfortably in the
    default scoped VMEM on all of v5e/v6e/v7x."""
    budget_bytes = 12 * 1024 * 1024
    # per output row: (3 input + 2 output) rows * W * 4B, double-buffered (x2)
    max_rows = max(8, budget_bytes // (40 * max(W, 1)))
    target = min(H, 512, (max_rows // 8) * 8)
    if H <= target:
        return H
    for cand in range(target, 7, -8):
        if H % cand == 0:
            return cand
    return H  # fall back to whole-image rows (full-dim block always legal)


def sobel_filter(x):
    """x: (N, 3, H, W) float32 -> (N, 2, H, W) float32 (grad_x, grad_y)."""
    N, C, H, W = x.shape
    assert C == 3 and H >= 2 and W >= 2
    TH = _pick_tile_h(H, W)
    nt = H // TH

    # Per-tile halo rows (reflection-padded at the image borders), gathered with
    # static indices; 2 rows per TH-row tile -> negligible extra HBM traffic.
    tid = np.arange(nt)
    top_rows = np.where(tid == 0, 1, tid * TH - 1).astype(np.int32)
    bot_rows = np.where(tid == nt - 1, H - 2, (tid + 1) * TH).astype(np.int32)
    top = x[:, :, top_rows, :]                       # (N, 3, nt, W)
    bot = x[:, :, bot_rows, :]                       # (N, 3, nt, W)
    halo = jnp.stack([top, bot], axis=-2)            # (N, 3, nt, 2, W)
    halo = jnp.transpose(halo, (0, 2, 1, 3, 4))      # (N, nt, 3, 2, W)

    kernel = functools.partial(_sobel_kernel, TH=TH, W=W)
    return pl.pallas_call(
        kernel,
        out_shape=jax.ShapeDtypeStruct((N, 2, H, W), x.dtype),
        grid=(N, nt),
        in_specs=[
            pl.BlockSpec((pl.Squeezed(), C, TH, W),
                         lambda b, i: (b, 0, i, 0)),
            pl.BlockSpec((pl.Squeezed(), pl.Squeezed(), C, 2, W),
                         lambda b, i: (b, i, 0, 0, 0)),
        ],
        out_specs=pl.BlockSpec((pl.Squeezed(), 2, TH, W),
                               lambda b, i: (b, 0, i, 0)),
        compiler_params=pltpu.CompilerParams(
            dimension_semantics=("parallel", "parallel")),
    )(x, halo)


def sobel_filter_ref(x):
    """Pure-JAX reference mirroring the PyTorch forward (bias included)."""
    bias = jnp.asarray(BIAS).reshape(1, 3, 1, 1)
    rgb_w = jnp.asarray(RGB_W).reshape(1, 3, 1, 1)
    g = jnp.sum((x + bias) * rgb_w, axis=1, keepdims=True)          # (N,1,H,W)
    pad = K_SOBEL // 2
    gp = jnp.pad(g, ((0, 0), (0, 0), (pad, pad), (pad, pad)), mode="reflect")
    fx = jnp.asarray(SOBEL_X).reshape(1, 1, K_SOBEL, K_SOBEL)
    fy = jnp.asarray(SOBEL_Y).reshape(1, 1, K_SOBEL, K_SOBEL)
    dn = lax.conv_dimension_numbers(gp.shape, fx.shape, ("NCHW", "OIHW", "NCHW"))
    gx = lax.conv_general_dilated(gp, fx, (1, 1), "VALID", dimension_numbers=dn)
    gy = lax.conv_general_dilated(gp, fy, (1, 1), "VALID", dimension_numbers=dn)
    return jnp.concatenate([gx, gy], axis=1)


if __name__ == "__main__":
    key = jax.random.PRNGKey(0)
    x = jax.random.normal(key, (2, 3, 16, 16), dtype=jnp.float32)

    out = jax.block_until_ready(sobel_filter(x))
    ref = jax.block_until_ready(sobel_filter_ref(x))

    assert out.shape == (2, 2, 16, 16)
    np.testing.assert_allclose(np.asarray(out), np.asarray(ref),
                               rtol=1e-5, atol=2e-5)
    print("KERNEL_OK")
</pallas_src>

<mosaic_0001>
module attributes {stable_mosaic.version = 11 : i64} {
  func.func @_sobel_kernel(%arg0: i32, %arg1: i32, %arg2: memref<1x3x16x16xf32, #tpu.memory_space<vmem>>, %arg3: memref<1x1x3x2x16xf32, #tpu.memory_space<vmem>>, %arg4: memref<1x2x16x16xf32, #tpu.memory_space<vmem>>) attributes {dimension_semantics = [#tpu.dimension_semantics<parallel>, #tpu.dimension_semantics<parallel>], iteration_bounds = array<i64: 2, 1>, scalar_prefetch = 0 : i64, scratch_operands = 0 : i64, tpu.core_type = #tpu.core_type<tc>, window_params = [{transform_indices = @transform_0, window_bounds = array<i64: 1, 3, 16, 16>}, {transform_indices = @transform_1, window_bounds = array<i64: 1, 1, 3, 2, 16>}, {transform_indices = @transform_2, window_bounds = array<i64: 1, 2, 16, 16>}]} {
    %c0 = arith.constant 0 : index
    %c0_0 = arith.constant 0 : index
    %c0_1 = arith.constant 0 : index
    %c0_2 = arith.constant 0 : index
    %0 = vector.load %arg2[%c0, %c0_0, %c0_1, %c0_2] : memref<1x3x16x16xf32, #tpu.memory_space<vmem>>, vector<1x1x16x16xf32>
    %1 = vector.shape_cast %0 : vector<1x1x16x16xf32> to vector<16x16xf32>
    %cst = arith.constant 2.990000e-01 : f32
    %2 = vector.broadcast %cst : f32 to vector<16x16xf32>
    %3 = arith.mulf %2, %1 : vector<16x16xf32>
    %c0_3 = arith.constant 0 : index
    %c1 = arith.constant 1 : index
    %c0_4 = arith.constant 0 : index
    %c0_5 = arith.constant 0 : index
    %4 = vector.load %arg2[%c0_3, %c1, %c0_4, %c0_5] : memref<1x3x16x16xf32, #tpu.memory_space<vmem>>, vector<1x1x16x16xf32>
    %5 = vector.shape_cast %4 : vector<1x1x16x16xf32> to vector<16x16xf32>
    %cst_6 = arith.constant 5.870000e-01 : f32
    %6 = vector.broadcast %cst_6 : f32 to vector<16x16xf32>
    %7 = arith.mulf %6, %5 : vector<16x16xf32>
    %8 = arith.addf %3, %7 : vector<16x16xf32>
    %c0_7 = arith.constant 0 : index
    %c2 = arith.constant 2 : index
    %c0_8 = arith.constant 0 : index
    %c0_9 = arith.constant 0 : index
    %9 = vector.load %arg2[%c0_7, %c2, %c0_8, %c0_9] : memref<1x3x16x16xf32, #tpu.memory_space<vmem>>, vector<1x1x16x16xf32>
    %10 = vector.shape_cast %9 : vector<1x1x16x16xf32> to vector<16x16xf32>
    %cst_10 = arith.constant 1.140000e-01 : f32
    %11 = vector.broadcast %cst_10 : f32 to vector<16x16xf32>
    %12 = arith.mulf %11, %10 : vector<16x16xf32>
    %13 = arith.addf %8, %12 : vector<16x16xf32>
    %c0_11 = arith.constant 0 : index
    %c0_12 = arith.constant 0 : index
    %c0_13 = arith.constant 0 : index
    %c0_14 = arith.constant 0 : index
    %c0_15 = arith.constant 0 : index
    %14 = vector.load %arg3[%c0_11, %c0_12, %c0_13, %c0_14, %c0_15] : memref<1x1x3x2x16xf32, #tpu.memory_space<vmem>>, vector<1x1x1x2x16xf32>
    %15 = vector.shape_cast %14 : vector<1x1x1x2x16xf32> to vector<2x16xf32>
    %cst_16 = arith.constant 2.990000e-01 : f32
    %16 = vector.broadcast %cst_16 : f32 to vector<2x16xf32>
    %17 = arith.mulf %16, %15 : vector<2x16xf32>
    %c0_17 = arith.constant 0 : index
    %c0_18 = arith.constant 0 : index
    %c1_19 = arith.constant 1 : index
    %c0_20 = arith.constant 0 : index
    %c0_21 = arith.constant 0 : index
    %18 = vector.load %arg3[%c0_17, %c0_18, %c1_19, %c0_20, %c0_21] : memref<1x1x3x2x16xf32, #tpu.memory_space<vmem>>, vector<1x1x1x2x16xf32>
    %19 = vector.shape_cast %18 : vector<1x1x1x2x16xf32> to vector<2x16xf32>
    %cst_22 = arith.constant 5.870000e-01 : f32
    %20 = vector.broadcast %cst_22 : f32 to vector<2x16xf32>
    %21 = arith.mulf %20, %19 : vector<2x16xf32>
    %22 = arith.addf %17, %21 : vector<2x16xf32>
    %c0_23 = arith.constant 0 : index
    %c0_24 = arith.constant 0 : index
    %c2_25 = arith.constant 2 : index
    %c0_26 = arith.constant 0 : index
    %c0_27 = arith.constant 0 : index
    %23 = vector.load %arg3[%c0_23, %c0_24, %c2_25, %c0_26, %c0_27] : memref<1x1x3x2x16xf32, #tpu.memory_space<vmem>>, vector<1x1x1x2x16xf32>
    %24 = vector.shape_cast %23 : vector<1x1x1x2x16xf32> to vector<2x16xf32>
    %cst_28 = arith.constant 1.140000e-01 : f32
    %25 = vector.broadcast %cst_28 : f32 to vector<2x16xf32>
    %26 = arith.mulf %25, %24 : vector<2x16xf32>
    %27 = arith.addf %22, %26 : vector<2x16xf32>
    %28 = vector.extract_strided_slice %27 {offsets = [0, 0], sizes = [1, 16], strides = [1, 1]} : vector<2x16xf32> to vector<1x16xf32>
    %29 = vector.extract_strided_slice %27 {offsets = [1, 0], sizes = [1, 16], strides = [1, 1]} : vector<2x16xf32> to vector<1x16xf32>
    %30 = tpu.concatenate %28, %13, %29 in 0 : vector<1x16xf32>, vector<16x16xf32>, vector<1x16xf32> -> vector<18x16xf32>
    %31 = vector.extract_strided_slice %30 {offsets = [0, 1], sizes = [18, 1], strides = [1, 1]} : vector<18x16xf32> to vector<18x1xf32>
    %32 = vector.extract_strided_slice %30 {offsets = [0, 14], sizes = [18, 1], strides = [1, 1]} : vector<18x16xf32> to vector<18x1xf32>
    %33 = tpu.concatenate %31, %30, %32 in 1 : vector<18x1xf32>, vector<18x16xf32>, vector<18x1xf32> -> vector<18x18xf32>
    %34 = vector.extract_strided_slice %33 {offsets = [0, 0], sizes = [18, 16], strides = [1, 1]} : vector<18x18xf32> to vector<18x16xf32>
    %35 = vector.extract_strided_slice %33 {offsets = [0, 1], sizes = [18, 16], strides = [1, 1]} : vector<18x18xf32> to vector<18x16xf32>
    %36 = vector.extract_strided_slice %33 {offsets = [0, 2], sizes = [18, 16], strides = [1, 1]} : vector<18x18xf32> to vector<18x16xf32>
    %37 = arith.subf %36, %34 : vector<18x16xf32>
    %38 = arith.addf %34, %36 : vector<18x16xf32>
    %cst_29 = arith.constant 5.000000e-01 : f32
    %39 = vector.broadcast %cst_29 : f32 to vector<18x16xf32>
    %40 = arith.mulf %39, %38 : vector<18x16xf32>
    %41 = arith.addf %40, %35 : vector<18x16xf32>
    %42 = vector.extract_strided_slice %37 {offsets = [0, 0], sizes = [16, 16], strides = [1, 1]} : vector<18x16xf32> to vector<16x16xf32>
    %43 = vector.extract_strided_slice %37 {offsets = [2, 0], sizes = [16, 16], strides = [1, 1]} : vector<18x16xf32> to vector<16x16xf32>
    %44 = arith.addf %42, %43 : vector<16x16xf32>
    %cst_30 = arith.constant 5.000000e-01 : f32
    %45 = vector.broadcast %cst_30 : f32 to vector<16x16xf32>
    %46 = arith.mulf %45, %44 : vector<16x16xf32>
    %47 = vector.extract_strided_slice %37 {offsets = [1, 0], sizes = [16, 16], strides = [1, 1]} : vector<18x16xf32> to vector<16x16xf32>
    %48 = arith.addf %46, %47 : vector<16x16xf32>
    %49 = vector.extract_strided_slice %41 {offsets = [2, 0], sizes = [16, 16], strides = [1, 1]} : vector<18x16xf32> to vector<16x16xf32>
    %50 = vector.extract_strided_slice %41 {offsets = [0, 0], sizes = [16, 16], strides = [1, 1]} : vector<18x16xf32> to vector<16x16xf32>
    %51 = arith.subf %49, %50 : vector<16x16xf32>
    %c0_31 = arith.constant 0 : index
    %c0_32 = arith.constant 0 : index
    %c0_33 = arith.constant 0 : index
    %c0_34 = arith.constant 0 : index
    %52 = vector.load %arg4[%c0_31, %c0_32, %c0_33, %c0_34] : memref<1x2x16x16xf32, #tpu.memory_space<vmem>>, vector<1x1x16x16xf32>
    %53 = vector.shape_cast %52 : vector<1x1x16x16xf32> to vector<16x16xf32>
    %54 = vector.shape_cast %48 : vector<16x16xf32> to vector<1x1x16x16xf32>
    tpu.vector_store %arg4[%c0_31, %c0_32, %c0_33, %c0_34], %54 {strides = array<i32>} : memref<1x2x16x16xf32, #tpu.memory_space<vmem>>, vector<1x1x16x16xf32>,
    %c0_35 = arith.constant 0 : index
    %c1_36 = arith.constant 1 : index
    %c0_37 = arith.constant 0 : index
    %c0_38 = arith.constant 0 : index
    %55 = vector.load %arg4[%c0_35, %c1_36, %c0_37, %c0_38] : memref<1x2x16x16xf32, #tpu.memory_space<vmem>>, vector<1x1x16x16xf32>
    %56 = vector.shape_cast %55 : vector<1x1x16x16xf32> to vector<16x16xf32>
    %57 = vector.shape_cast %51 : vector<16x16xf32> to vector<1x1x16x16xf32>
    tpu.vector_store %arg4[%c0_35, %c1_36, %c0_37, %c0_38], %57 {strides = array<i32>} : memref<1x2x16x16xf32, #tpu.memory_space<vmem>>, vector<1x1x16x16xf32>,
    return
  }
  func.func @transform_0(%arg0: i32, %arg1: i32) -> (i32, i32, i32, i32) {
    %c0_i32 = arith.constant 0 : i32
    %c0_i32_0 = arith.constant 0 : i32
    %c0_i32_1 = arith.constant 0 : i32
    return %arg0, %c0_i32, %arg1, %c0_i32_0 : i32, i32, i32, i32
  }
  func.func @transform_1(%arg0: i32, %arg1: i32) -> (i32, i32, i32, i32, i32) {
    %c0_i32 = arith.constant 0 : i32
    %c0_i32_0 = arith.constant 0 : i32
    %c0_i32_1 = arith.constant 0 : i32
    %c0_i32_2 = arith.constant 0 : i32
    return %arg0, %arg1, %c0_i32, %c0_i32_0, %c0_i32_1 : i32, i32, i32, i32, i32
  }
  func.func @transform_2(%arg0: i32, %arg1: i32) -> (i32, i32, i32, i32) {
    %c0_i32 = arith.constant 0 : i32
    %c0_i32_0 = arith.constant 0 : i32
    %c0_i32_1 = arith.constant 0 : i32
    return %arg0, %c0_i32, %arg1, %c0_i32_0 : i32, i32, i32, i32
  }
}

</mosaic_0001>

<llo_original>
// kernel: tpu_custom_call.1
$region0: #{tpu_custom_call.1}
  #allocation0 [shape = 'u32[]', space=smem, size = 0x4, offset = 0x4, fixed_abs, tag = 'smem constant byte address 0x4 - core index']
  #allocation1 [shape = 'u32[72,128]{1,0:T(1,128)}', space=vmem, size = 0x9000, scoped, tag = 'internal scratch']
  %s0 = inlined_call_operand.hbm [shape: f32[2,3,16,16], index: 0, kind: input, shape index: {}]
  %s1 = inlined_call_operand.hbm [shape: f32[2,1,3,2,16], index: 1, kind: input, shape index: {}]
  %s2 = inlined_call_operand.hbm [shape: f32[2,2,16,16], index: 2, kind: output, shape index: {}]
  %s3 = sld [smem:[#allocation0]]
  $region49: #{tpu_custom_call.1} parent=0
    _
  %s5 = ssub.s32 1, %s3
  %s6 = scalar_select 0, %s5, %s3
  $region1: #{tpu_custom_call.1} parent=0
    #allocation2 [shape = 'u8[49152]{0}', space=vmem, size = 0xc000, scoped, tag = 'input window, operand 0']
    #allocation3 [shape = 's32[2]{0}', space=sflag, size = 0x8, scoped, tag = 'scoped memory for tpu_custom_call.1']
    #allocation4 [shape = 's32[2]{0}', space=sflag, size = 0x8, scoped, tag = 'scoped memory for tpu_custom_call.1']
    #allocation5 [shape = 'u8[6144]{0}', space=vmem, size = 0x1800, scoped, tag = 'input window, operand 1']
    #allocation6 [shape = 's32[2]{0}', space=sflag, size = 0x8, scoped, tag = 'scoped memory for tpu_custom_call.1']
    #allocation7 [shape = 'u8[32768]{0}', space=vmem, size = 0x8000, scoped, tag = 'output window, operand 0']
    %7 = vsyncpa [#allocation3], 0
    %s8 = scalar_lea.sflag [#allocation3], 1
    %9 = vsyncpa %s8, 0
    %10 = vsyncpa [#allocation6], 0
    %s11 = scalar_lea.sflag [#allocation6], 1
    %12 = vsyncpa %s11, 0
    %13 = vsyncpa [#allocation4], 0
    %s14 = scalar_lea.sflag [#allocation4], 1
    %15 = vsyncpa %s14, 0
    loop: start=0, step=1, limit=4
    $region2: #{tpu_custom_call.1} parent=1 // loop_pre_header
      _
    $region3: #{tpu_custom_call.1} parent=1 // loop_header
      %s17 = sphi 0, %s21
      %p18 = scmp.ge.s32.totalorder %s17, 4
      %s24 = sphi 0, %s36
      %s25 = sphi 0, %s32
      %s26 = sphi 0, %s24
      %s27 = sphi 0, %s25
      %s28 = sphi 0, %s26
      %s29 = sphi 0, %s27
      %s41 = sphi 0, %s43
      %s44 = sphi 0, %s41
      %s45 = sphi 0, %s44
      %s61 = sphi 0, %s45
      %s69 = sphi 0, %s71
      %s72 = sphi 0, %s69
      %s73 = sphi 0, %s72
      %s89 = sphi 0, %s73
      %s97 = sphi 0, %s99
      %s100 = sphi 0, %s97
      %s101 = sphi 0, %s100
      %s117 = sphi 0, %s101
    $region4: #{tpu_custom_call.1} parent=1 // loop_header_branch
      %20 = sbr.rel (%p18) target = $region8
    $region5: #{tpu_custom_call.1} parent=1 // loop_body
      %s22 = ssub.s32 %s17, 1
      %s23 = ssub.s32 %s17, 2
      %s30 = sadd.s32 1, %s25
      %p31 = scmp.ge.s32.totalorder %s30, 1
      %s32 = scalar_select %p31, 0, %s30
      %s33 = sadd.s32 1, %s24
      %s34 = scalar_select %p31, %s33, %s24
      %p35 = scmp.ge.s32.totalorder %s34, 2
      %s36 = scalar_select %p35, 0, %s34
      %s37 = ssub.s32 %s24, %s36
      %s38 = ssub.s32 %s25, %s32
      %s39 = sor.u32 %s37, %s38
      %p40 = scmp.eq.s32.totalorder %s39, 0
      %s42 = sadd.s32 %s41, 1
      %s43 = scalar_select %p40, %s41, %s42
      %p46 = pneg %p40
      %p47 = scmp.eq.s32.totalorder %s17, 1
      %p48 = por %p46, %p47
      %p49 = scmp.ne.s32.totalorder %s41, %s44
      %p50 = scmp.eq.s32.totalorder %s17, 0
      %p51 = por %p49, %p50
      %p52 = scmp.ne.s32.totalorder %s41, %s44
      %p53 = scmp.eq.s32.totalorder %s22, 1
      %p54 = por %p52, %p53
      %p55 = scmp.ne.s32.totalorder %s44, %s45
      %p56 = scmp.eq.s32.totalorder %s22, 0
      %p57 = por %p55, %p56
      %p58 = scmp.ne.s32.totalorder %s44, %s45
      %p59 = scmp.eq.s32.totalorder %s23, 1
      %p60 = por %p58, %p59
      %p62 = scmp.ne.s32.totalorder %s45, %s61
      %p63 = scmp.eq.s32.totalorder %s23, 0
      %p64 = por %p62, %p63
      %s65 = ssub.s32 %s24, %s36
      %s66 = ssub.s32 %s25, %s32
      %s67 = sor.u32 %s65, %s66
      %p68 = scmp.eq.s32.totalorder %s67, 0
      %s70 = sadd.s32 %s69, 1
      %s71 = scalar_select %p68, %s69, %s70
      %p74 = pneg %p68
      %p75 = scmp.eq.s32.totalorder %s17, 1
      %p76 = por %p74, %p75
      %p77 = scmp.ne.s32.totalorder %s69, %s72
      %p78 = scmp.eq.s32.totalorder %s17, 0
      %p79 = por %p77, %p78
      %p80 = scmp.ne.s32.totalorder %s69, %s72
      %p81 = scmp.eq.s32.totalorder %s22, 1
      %p82 = por %p80, %p81
      %p83 = scmp.ne.s32.totalorder %s72, %s73
      %p84 = scmp.eq.s32.totalorder %s22, 0
      %p85 = por %p83, %p84
      %p86 = scmp.ne.s32.totalorder %s72, %s73
      %p87 = scmp.eq.s32.totalorder %s23, 1
      %p88 = por %p86, %p87
      %p90 = scmp.ne.s32.totalorder %s73, %s89
      %p91 = scmp.eq.s32.totalorder %s23, 0
      %p92 = por %p90, %p91
      %s93 = ssub.s32 %s24, %s36
      %s94 = ssub.s32 %s25, %s32
      %s95 = sor.u32 %s93, %s94
      %p96 = scmp.eq.s32.totalorder %s95, 0
      %s98 = sadd.s32 %s97, 1
      %s99 = scalar_select %p96, %s97, %s98
      %p102 = pneg %p96
      %p103 = scmp.eq.s32.totalorder %s17, 1
      %p104 = por %p102, %p103
      %p105 = scmp.ne.s32.totalorder %s97, %s100
      %p106 = scmp.eq.s32.totalorder %s17, 0
      %p107 = por %p105, %p106
      %p108 = scmp.ne.s32.totalorder %s97, %s100
      %p109 = scmp.eq.s32.totalorder %s22, 1
      %p110 = por %p108, %p109
      %p111 = scmp.ne.s32.totalorder %s100, %s101
      %p112 = scmp.eq.s32.totalorder %s22, 0
      %p113 = por %p111, %p112
      %p114 = scmp.ne.s32.totalorder %s100, %s101
      %p115 = scmp.eq.s32.totalorder %s23, 1
      %p116 = por %p114, %p115
      %p118 = scmp.ne.s32.totalorder %s101, %s117
      %p119 = scmp.eq.s32.totalorder %s23, 0
      %p120 = por %p118, %p119
      %p121 = scmp.le.s32.totalorder 1, %s17
      %p122 = scmp.lt.s32.totalorder %s17, 3
      %p123 = pnand %p121, %p122
      %p124 = pneg %p123
      // Predicated region
      $region9: #{tpu_custom_call.1} parent=5 // pred_check
        _
      $region10: #{tpu_custom_call.1} parent=5 // pred_check_branch
        %126 = sbr.rel (%p123) target = $region12
      $region11: #{tpu_custom_call.1} parent=5 // pred_region
        %s127 = ssub.s32 %s17, 1
      $region12: #{tpu_custom_call.1} parent=5 // pred_fallthru
        _
      %p128 = scmp.lt.s32.totalorder %s17, 2
      // Predicated region
      $region13: #{tpu_custom_call.1} parent=5 // pred_check
        %p129 = pneg %p128
      $region14: #{tpu_custom_call.1} parent=5 // pred_check_branch
        %131 = sbr.rel (%p129) target = $region16
      $region15: #{tpu_custom_call.1} parent=5 // pred_region
        // Predicated region
        $region17: #{tpu_custom_call.1} parent=15 // pred_check
          %p132 = pneg %p51
        $region18: #{tpu_custom_call.1} parent=15 // pred_check_branch
          %134 = sbr.rel (%p132) target = $region20
        $region19: #{tpu_custom_call.1} parent=15 // pred_region
          %s135 = sand.u32 %s41, 1
          %s136 = scalar_lea.sflag [#allocation3], %s135
          %s137 = sand.u32 %s41, 1
          %s138 = smul.addr %s137, 48
          %s139 = scalar_lea.vmem [#allocation2], %s138
          %s140 = smul.u32 2, %s25
          %142 = vsyncadd %s136, 0
          %s143 = smul.addr %s24, 6
          %s144 = sadd.s32 %s140, %s143
          %s145 = smul.addr %s144, 8
          %s146 = scalar_lea.hbm %s0, %s145
          %s147 = sshll.u32 %s146, 4
          %s148 = int_to_ptr.hbm [resolvable:$true] %s147
          %s149 = sshll.u32 %s139, 4
          %s150 = int_to_ptr.vmem [resolvable:$true] %s149
          %155 = dma.hbm_to_vmem [thread:$0]  %s148, 768, %s150, %s136, 128, 128, 8
        $region20: #{tpu_custom_call.1} parent=15 // pred_fallthru
          _
        // Predicated region
        $region21: #{tpu_custom_call.1} parent=15 // pred_check
          %p156 = pneg %p79
        $region22: #{tpu_custom_call.1} parent=15 // pred_check_branch
          %158 = sbr.rel (%p156) target = $region24
        $region23: #{tpu_custom_call.1} parent=15 // pred_region
          %s159 = sand.u32 %s69, 1
          %s160 = scalar_lea.sflag [#allocation6], %s159
          %s161 = sand.u32 %s69, 1
          %s162 = smul.addr %s161, 6
          %s163 = scalar_lea.vmem [#allocation5], %s162
          %165 = vsyncadd %s160, 0
          %s166 = smul.addr %s25, 3
          %s167 = smul.addr %s24, 3
          %s168 = sadd.s32 %s166, %s167
          %s169 = smul.addr %s168, 2
          %s170 = scalar_lea.hbm %s1, %s169
          %s171 = sshll.u32 %s170, 4
          %s172 = int_to_ptr.hbm [resolvable:$true] %s171
          %s173 = sshll.u32 %s163, 4
          %s174 = int_to_ptr.vmem [resolvable:$true] %s173
          %179 = dma.hbm_to_vmem [thread:$0]  %s172, 96, %s174, %s160, 32, 32, 2
        $region24: #{tpu_custom_call.1} parent=15 // pred_fallthru
          _
      $region16: #{tpu_custom_call.1} parent=5 // pred_fallthru
        _
      %p180 = scmp.le.s32.totalorder 1, %s17
      %p181 = scmp.lt.s32.totalorder %s17, 3
      %p182 = pnand %p180, %p181
      %p183 = pneg %p182
      // Predicated region
      $region25: #{tpu_custom_call.1} parent=5 // pred_check
        _
      $region26: #{tpu_custom_call.1} parent=5 // pred_check_branch
        %185 = sbr.rel (%p182) target = $region28
      $region27: #{tpu_custom_call.1} parent=5 // pred_region
        %s186 = ssub.s32 %s17, 1
        %s187 = sand.u32 %s44, 1
        %s188 = scalar_lea.sflag [#allocation3], %s187
        %s189 = sand.u32 %s44, 1
        %s190 = smul.addr %s189, 48
        %s191 = scalar_lea.vmem [#allocation2], %s190
        // Predicated region
        $region29: #{tpu_custom_call.1} parent=27 // pred_check
          %p192 = pneg %p57
        $region30: #{tpu_custom_call.1} parent=27 // pred_check_branch
          %194 = sbr.rel (%p192) target = $region32
        $region31: #{tpu_custom_call.1} parent=27 // pred_region
          %196 = dma.done %s188, 768
        $region32: #{tpu_custom_call.1} parent=27 // pred_fallthru
          _
        %s197 = sand.u32 %s72, 1
        %s198 = scalar_lea.sflag [#allocation6], %s197
        %s199 = sand.u32 %s72, 1
        %s200 = smul.addr %s199, 6
        %s201 = scalar_lea.vmem [#allocation5], %s200
        // Predicated region
        $region33: #{tpu_custom_call.1} parent=27 // pred_check
          %p202 = pneg %p85
        $region34: #{tpu_custom_call.1} parent=27 // pred_check_branch
          %204 = sbr.rel (%p202) target = $region36
        $region35: #{tpu_custom_call.1} parent=27 // pred_region
          %206 = dma.done %s198, 96
        $region36: #{tpu_custom_call.1} parent=27 // pred_fallthru
          _
        %s207 = sand.u32 %s44, 1
        %s208 = scalar_lea.sflag [#allocation3], %s207
        %s209 = sand.u32 %s44, 1
        %s210 = smul.addr %s209, 48
        %s211 = scalar_lea.vmem [#allocation2], %s210
        %p212 = pneg %p57
        %p213 = pneg %p54
        %s214 = sand.u32 %s72, 1
        %s215 = scalar_lea.sflag [#allocation6], %s214
        %s216 = sand.u32 %s72, 1
        %s217 = smul.addr %s216, 6
        %s218 = scalar_lea.vmem [#allocation5], %s217
        %p219 = pneg %p85
        %p220 = pneg %p82
        %p221 = pneg %p113
        %p222 = pneg %p110
        %s223 = sand.u32 %s100, 1
        %s224 = scalar_lea.sflag [#allocation4], %s223
        %s225 = sand.u32 %s100, 1
        %s226 = smul.addr %s225, 32
        %s227 = scalar_lea.vmem [#allocation7], %s226
        %s228 = smul.u32 2, %s27
        %s229 = smul.u32 2, %s27
        %v230 = vld [vmem:[%s191] sm:$0xff]
        %v231 = vld [vmem:[%s191 + $0x8] sm:$0xff]
        %v232 = vmul.f32 %v230, 0.299
        %v233 = vmul.f32 %v231, 0.299
        %s234 = scalar_lea.vmem %s191, 16 [#allocation2]
        %v235 = vld [vmem:[%s234] sm:$0xff]
        %v236 = vld [vmem:[%s234 + $0x8] sm:$0xff]
        %v237 = vmul.f32 %v235, 0.587
        %v238 = vmul.f32 %v236, 0.587
        %v239 = vadd.f32 %v232, %v237
        %v240 = vadd.f32 %v233, %v238
        %s241 = scalar_lea.vmem %s191, 32 [#allocation2]
        %v242 = vld [vmem:[%s241] sm:$0xff]
        %v243 = vld [vmem:[%s241 + $0x8] sm:$0xff]
        %v244 = vmul.f32 %v242, 0.114
        %v245 = vmul.f32 %v243, 0.114
        %v246 = vadd.f32 %v239, %v244
        %v247 = vadd.f32 %v240, %v245
        %v248 = vld [vmem:[%s201] sm:$0x3]
        %v249 = vmul.f32 %v248, 0.299
        %s250 = scalar_lea.vmem %s201, 2 [#allocation5]
        %v251 = vld [vmem:[%s250] sm:$0x3]
        %v252 = vmul.f32 %v251, 0.587
        %v253 = vadd.f32 %v249, %v252
        %s254 = scalar_lea.vmem %s201, 4 [#allocation5]
        %v255 = vld [vmem:[%s254] sm:$0x3]
        %v256 = vmul.f32 %v255, 0.114
        %v257 = vadd.f32 %v253, %v256
        %vm260 = vcmask 1040384
        %v261 = vrot.slane %v246, 7
        %v262 = vrot.slane %v247, 7
        %v263 = vsel %vm260, %v261, %v262
        %v266 = vsel %vm260, %v257, %v261
        %v267 = vsel %vm260, %v262, %v257
        %270 = vrot.lane.b32.xlu0 %v266, 127
        %v271 = vpop.permute.xlu0 %270
        %272 = vrot.lane.b32.xlu0 %v263, 127
        %v273 = vpop.permute.xlu0 %272
        %274 = vrot.lane.b32.xlu0 %v267, 127
        %v275 = vpop.permute.xlu0 %274
        %279 = vrot.lane.b32.xlu0 %v266, 1
        %v280 = vpop.permute.xlu0 %279
        %281 = vrot.lane.b32.xlu0 %v263, 1
        %v282 = vpop.permute.xlu0 %281
        %283 = vrot.lane.b32.xlu0 %v267, 1
        %v284 = vpop.permute.xlu0 %283
        %288 = vrot.lane.b32.xlu0 %v266, 3
        %v289 = vpop.permute.xlu0 %288
        %290 = vrot.lane.b32.xlu0 %v263, 3
        %v291 = vpop.permute.xlu0 %290
        %292 = vrot.lane.b32.xlu0 %v267, 3
        %v293 = vpop.permute.xlu0 %292
        %vm297 = vcmask 7168
        %v298 = vsel %vm297, %v271, %v280
        %v299 = vsel %vm297, %v273, %v282
        %v300 = vsel %vm297, %v275, %v284
        %vm301 = vcmask 138240
        %v302 = vsel %vm301, %v298, %v289
        %v303 = vsel %vm301, %v299, %v291
        %v304 = vsel %vm301, %v300, %v293
        %308 = vrot.lane.b32.xlu0 %v302, 2
        %v309 = vpop.permute.xlu0 %308
        %310 = vrot.lane.b32.xlu0 %v303, 2
        %v311 = vpop.permute.xlu0 %310
        %312 = vrot.lane.b32.xlu0 %v304, 2
        %v313 = vpop.permute.xlu0 %312
        %v317 = vsub.f32 %v302, %v309
        %v318 = vsub.f32 %v303, %v311
        %v319 = vsub.f32 %v304, %v313
        %320 = vrot.lane.b32.xlu0 %v302, 126
        %v321 = vpop.permute.xlu0 %320
        %322 = vrot.lane.b32.xlu0 %v303, 126
        %v323 = vpop.permute.xlu0 %322
        %324 = vrot.lane.b32.xlu0 %v304, 126
        %v325 = vpop.permute.xlu0 %324
        %v329 = vadd.f32 %v302, %v321
        %v330 = vadd.f32 %v303, %v323
        %v331 = vadd.f32 %v304, %v325
        %v332 = vmul.f32 %v329, 0.5
        %v333 = vmul.f32 %v330, 0.5
        %v334 = vmul.f32 %v331, 0.5
        %335 = vrot.lane.b32.xlu0 %v302, 127
        %v336 = vpop.permute.xlu0 %335
        %337 = vrot.lane.b32.xlu0 %v303, 127
        %v338 = vpop.permute.xlu0 %337
        %339 = vrot.lane.b32.xlu0 %v304, 127
        %v340 = vpop.permute.xlu0 %339
        %v344 = vadd.f32 %v332, %v336
        %v345 = vadd.f32 %v333, %v338
        %v346 = vadd.f32 %v334, %v340
        %vm350 = vcmask 1045504
        %v351 = vrot.slane %v317, 2
        %v352 = vrot.slane %v318, 2
        %v353 = vsel %vm350, %v351, %v352
        %v354 = vrot.slane %v319, 2
        %v355 = vsel %vm350, %v352, %v354
        %v358 = vadd.f32 %v317, %v353
        %v359 = vadd.f32 %v318, %v355
        %v360 = vmul.f32 %v358, 0.5
        %v361 = vmul.f32 %v359, 0.5
        %vm362 = vcmask 1046528
        %v363 = vrot.slane %v317, 1
        %v364 = vrot.slane %v318, 1
        %v365 = vsel %vm362, %v363, %v364
        %v366 = vrot.slane %v319, 1
        %v367 = vsel %vm362, %v364, %v366
        %v370 = vadd.f32 %v360, %v365
        %v371 = vadd.f32 %v361, %v367
        %vm374 = vcmask 1041408
        %v375 = vrot.slane %v344, 6
        %v376 = vrot.slane %v345, 6
        %v377 = vsel %vm374, %v375, %v376
        %v381 = vsub.f32 %v344, %v375
        %v382 = vsub.f32 %v345, %v377
        %v383 = vsub.f32 %v346, %v376
        %386 = vrot.lane.b32.xlu0 %v370, 126
        %v387 = vpop.permute.xlu0 %386
        %388 = vrot.lane.b32.xlu0 %v371, 126
        %v389 = vpop.permute.xlu0 %388
        %vm392 = vcmask 130048
        %393 = vst.msk [vmem:[%s227] sm:$0xff] %vm392, %v387
        %394 = vst.msk [vmem:[%s227 + $0x8] sm:$0xff] %vm392, %v389
        %s395 = scalar_lea.vmem %s227, 16 [#allocation7]
        %vm396 = vcmask 130050
        %397 = vst.msk [vmem:[%s395 - $0x2] sm:$0xfc] %vm396, %v381
        %398 = vst.msk [vmem:[%s395 + $0x6] sm:$0xff] %vm392, %v382
        %vm399 = vcmask 123904
        %400 = vst.msk [vmem:[%s395 + $0xe] sm:$0x3] %vm399, %v383
        %s401 = sand.u32 %s100, 1
        %s402 = scalar_lea.sflag [#allocation4], %s401
        %s403 = sand.u32 %s100, 1
        %s404 = smul.addr %s403, 32
        %s405 = scalar_lea.vmem [#allocation7], %s404
        // Predicated region
        $region37: #{tpu_custom_call.1} parent=27 // pred_check
          %p406 = pneg %p110
        $region38: #{tpu_custom_call.1} parent=27 // pred_check_branch
          %408 = sbr.rel (%p406) target = $region40
        $region39: #{tpu_custom_call.1} parent=27 // pred_region
          %s409 = smul.u32 2, %s27
          %411 = vsyncadd %s402, 0
          %s412 = smul.addr %s26, 4
          %s413 = sadd.s32 %s409, %s412
          %s414 = smul.addr %s413, 8
          %s415 = scalar_lea.hbm %s2, %s414
          %s416 = sshll.u32 %s405, 4
          %s417 = int_to_ptr.vmem [resolvable:$true] %s416
          %s418 = sshll.u32 %s415, 4
          %s419 = int_to_ptr.hbm [resolvable:$true] %s418
          %424 = dma.vmem_to_hbm [thread:$0]  %s417, 512, %s419, %s402, 128, 128, 8
        $region40: #{tpu_custom_call.1} parent=27 // pred_fallthru
          _
      $region28: #{tpu_custom_call.1} parent=5 // pred_fallthru
        _
      %p425 = scmp.le.s32.totalorder 2, %s17
      // Predicated region
      $region41: #{tpu_custom_call.1} parent=5 // pred_check
        %p426 = pneg %p425
      $region42: #{tpu_custom_call.1} parent=5 // pred_check_branch
        %428 = sbr.rel (%p426) target = $region44
      $region43: #{tpu_custom_call.1} parent=5 // pred_region
        %s429 = ssub.s32 %s17, 2
        // Predicated region
        $region45: #{tpu_custom_call.1} parent=43 // pred_check
          %p430 = pneg %p116
        $region46: #{tpu_custom_call.1} parent=43 // pred_check_branch
          %432 = sbr.rel (%p430) target = $region48
        $region47: #{tpu_custom_call.1} parent=43 // pred_region
          %s433 = sand.u32 %s101, 1
          %s434 = scalar_lea.sflag [#allocation4], %s433
          %s435 = sand.u32 %s101, 1
          %s436 = smul.addr %s435, 32
          %s437 = scalar_lea.vmem [#allocation7], %s436
          %439 = dma.done %s434, 512
        $region48: #{tpu_custom_call.1} parent=43 // pred_fallthru
          _
      $region44: #{tpu_custom_call.1} parent=5 // pred_fallthru
        _
    $region6: #{tpu_custom_call.1} parent=1 // loop_footer
      %s21 = sadd.s32 1, %s17
    $region7: #{tpu_custom_call.1} parent=1 // loop_footer_branch
      %16 = sbr.rel target = $region3
    $region8: #{tpu_custom_call.1} parent=1 // loop_exit
      _
    %440 = vsyncpa [#allocation3], 1
    %s441 = scalar_lea.sflag [#allocation3], 1
    %442 = vsyncpa %s441, 1
    %443 = vsyncpa [#allocation6], 1
    %s444 = scalar_lea.sflag [#allocation6], 1
    %445 = vsyncpa %s444, 1
    %446 = vsyncpa [#allocation4], 1
    %s447 = scalar_lea.sflag [#allocation4], 1
    %448 = vsyncpa %s447, 1

</llo_original>
